<compile_context>
chip_gen: v5e
topology: v5e:2x2
jax: 0.10.0
libtpu: 0.0.40
codegen_flags: <defaults>
</compile_context>

<pallas_src>
from math import pi

import jax
import jax.numpy as jnp
from jax.experimental import pallas as pl
from jax.experimental.pallas import tpu as pltpu

N_MODE = 10


def _round_up(x, m):
    return ((x + m - 1) // m) * m


def mixture_logdensity_kernel(a_ref, b_ref, c_ref, z_ref, out_ref):
    # z_ref:   [D, TB] VMEM tile (batch on lanes, features on sublanes)
    # a/b/c_ref: [K] SMEM scalars
    # out_ref: [1, TB] VMEM (lane-dense)
    z = z_ref[...].astype(jnp.float32)
    K = a_ref.shape[0]

    # Read per-component scalars once; they become sreg operands of the VALU ops
    # (no per-iteration broadcasts in the vector path).
    a = [a_ref[k] for k in range(K)]   # 1 / (sigma_k * sqrt(2))
    b = [b_ref[k] for k in range(K)]   # mu_k / (sigma_k * sqrt(2))
    c = [c_ref[k] for k in range(K)]   # -log(sigma_k) - 0.5*log(2*pi) - log(K)

    def lp(k):
        t = z * a[k] - b[k]
        return c[k] - t * t

    # ---- Pass 1: running max of the K component log-densities (VALU only). ----
    m = lp(0)
    for k in range(1, K):
        m = jnp.maximum(m, lp(k))

    # ---- Pass 2: recompute lp_k and accumulate exp(lp_k - m) (K exps on EUP). ----
    s = jnp.exp(lp(0) - m)
    for k in range(1, K):
        s = s + jnp.exp(lp(k) - m)

    lse = m + jnp.log(s)                                  # [D, TB] mixture log prob
    # .sum(1) in the original layout == reduce over the feature (sublane) axis here.
    out_ref[...] = jnp.sum(lse, axis=0, keepdims=True)    # [1, TB] lane-dense store


def mixture_log_density(z, mu, sigma, *, tb=8192):
    """z: [B, D] float array; mu/sigma: [K]. Returns [B] float32."""
    B, D = z.shape
    K = mu.shape[0]

    # Lane-dense layout: batch on the last (lane) axis.
    zT = jnp.transpose(z.astype(jnp.float32))             # [D, B]

    # Batch tile: multiple of 128 lanes, capped by VMEM (<= ~2 MiB of z per tile,
    # double-buffered) and by the padded batch.
    max_tb_vmem = max(128, ((2 * 1024 * 1024) // (4 * D)) // 128 * 128)
    tb = max(128, min(_round_up(int(tb), 128), max_tb_vmem, _round_up(B, 128)))
    Bp = pl.cdiv(B, tb) * tb
    if Bp != B:
        zT = jnp.pad(zT, ((0, 0), (0, Bp - B)))           # padded cols are discarded

    # Hoist all per-component scalar math out of the vector path (EUP/VALU relief):
    #   lp_k(z) = c_k - (z*a_k - b_k)^2
    log_mix = -jnp.log(jnp.float32(K))                    # Categorical(ones(K))
    sigma_f = sigma.astype(jnp.float32)
    a = (1.0 / (sigma_f * jnp.sqrt(jnp.float32(2.0)))).astype(jnp.float32)
    b = (mu.astype(jnp.float32) * a).astype(jnp.float32)
    c = (-jnp.log(sigma_f) - 0.5 * jnp.log(2.0 * jnp.float32(pi)) + log_mix)

    d_pad = _round_up(D, 8)
    tile_bytes = d_pad * tb * 4
    # Double-buffered z tiles + ~4 live f32 temporaries, with headroom, capped so
    # the same code stays safe on v7x's smaller (64 MiB) VMEM.
    vmem_limit = int(min(48 * 1024 * 1024, max(16 * 1024 * 1024, 10 * tile_bytes)))

    out = pl.pallas_call(
        mixture_logdensity_kernel,
        out_shape=jax.ShapeDtypeStruct((1, Bp), jnp.float32),
        grid=(Bp // tb,),
        in_specs=[
            pl.BlockSpec(memory_space=pltpu.MemorySpace.SMEM),     # a  [K]
            pl.BlockSpec(memory_space=pltpu.MemorySpace.SMEM),     # b  [K]
            pl.BlockSpec(memory_space=pltpu.MemorySpace.SMEM),     # c  [K]
            pl.BlockSpec((D, tb), lambda i: (0, i)),               # zT tile
        ],
        out_specs=pl.BlockSpec((1, tb), lambda i: (0, i)),
        compiler_params=pltpu.CompilerParams(
            dimension_semantics=("parallel",),                     # 2 TCs on v7x
            vmem_limit_bytes=vmem_limit,
        ),
        cost_estimate=pl.CostEstimate(
            flops=B * D * (8 * K + 6),
            transcendentals=B * D * (K + 1),                       # K exps + 1 log
            bytes_accessed=4 * B * D + 4 * B,
        ),
    )(a, b, c, zT)
    return out[0, :B]


def mixture_log_density_ref(z, mu, sigma):
    # Plain-JAX reference mirroring torch.distributions.MixtureSameFamily.
    K = mu.shape[0]
    log_mix = -jnp.log(jnp.float32(K))
    zk = z[..., None]                                      # [B, D, K]
    lp = (-0.5 * ((zk - mu) / sigma) ** 2
          - jnp.log(sigma)
          - 0.5 * jnp.log(2.0 * jnp.float32(pi))
          + log_mix)
    return jax.scipy.special.logsumexp(lp, axis=-1).sum(axis=1)


if __name__ == "__main__":
    # Deterministic buffer init (matches the PyTorch __init__).
    mu = jnp.arange(-3.0, 3.0001, 6.0 / float(N_MODE - 1), dtype=jnp.float32)[:N_MODE]
    sigma = jnp.ones((N_MODE,), jnp.float32) * 1.5 / float(N_MODE)

    # Small deterministic input: z is [batch=8, dim=16].
    key = jax.random.PRNGKey(0)
    z = jax.random.normal(key, (8, 16), dtype=jnp.float32) * 2.0

    out = mixture_log_density(z, mu, sigma)
    out = jax.block_until_ready(out)

    ref = mixture_log_density_ref(z, mu, sigma)
    assert out.shape == (8,)
    assert jnp.allclose(out, ref, rtol=1e-4, atol=1e-4), (out, ref)

    print("KERNEL_OK")
</pallas_src>

<mosaic_0001>
module attributes {stable_mosaic.version = 11 : i64} {
  func.func @mixture_logdensity_kernel(%arg0: i32, %arg1: memref<10xf32, #tpu.memory_space<smem>>, %arg2: memref<10xf32, #tpu.memory_space<smem>>, %arg3: memref<10xf32, #tpu.memory_space<smem>>, %arg4: memref<16x128xf32, #tpu.memory_space<vmem>>, %arg5: memref<1x128xf32, #tpu.memory_space<vmem>>) attributes {dimension_semantics = [#tpu.dimension_semantics<parallel>], iteration_bounds = array<i64: 1>, scalar_prefetch = 0 : i64, scratch_operands = 0 : i64, tpu.core_type = #tpu.core_type<tc>, window_params = [{transform_indices = @transform_0, window_bounds = array<i64: 10>}, {transform_indices = @transform_1, window_bounds = array<i64: 10>}, {transform_indices = @transform_2, window_bounds = array<i64: 10>}, {transform_indices = @transform_3, window_bounds = array<i64: 16, 128>}, {transform_indices = @transform_4, window_bounds = array<i64: 1, 128>}]} {
    %c0 = arith.constant 0 : index
    %c0_0 = arith.constant 0 : index
    %0 = vector.load %arg4[%c0, %c0_0] : memref<16x128xf32, #tpu.memory_space<vmem>>, vector<16x128xf32>
    %c0_1 = arith.constant 0 : index
    %1 = memref.load %arg1[%c0_1] : memref<10xf32, #tpu.memory_space<smem>>
    %c1 = arith.constant 1 : index
    %2 = memref.load %arg1[%c1] : memref<10xf32, #tpu.memory_space<smem>>
    %c2 = arith.constant 2 : index
    %3 = memref.load %arg1[%c2] : memref<10xf32, #tpu.memory_space<smem>>
    %c3 = arith.constant 3 : index
    %4 = memref.load %arg1[%c3] : memref<10xf32, #tpu.memory_space<smem>>
    %c4 = arith.constant 4 : index
    %5 = memref.load %arg1[%c4] : memref<10xf32, #tpu.memory_space<smem>>
    %c5 = arith.constant 5 : index
    %6 = memref.load %arg1[%c5] : memref<10xf32, #tpu.memory_space<smem>>
    %c6 = arith.constant 6 : index
    %7 = memref.load %arg1[%c6] : memref<10xf32, #tpu.memory_space<smem>>
    %c7 = arith.constant 7 : index
    %8 = memref.load %arg1[%c7] : memref<10xf32, #tpu.memory_space<smem>>
    %c8 = arith.constant 8 : index
    %9 = memref.load %arg1[%c8] : memref<10xf32, #tpu.memory_space<smem>>
    %c9 = arith.constant 9 : index
    %10 = memref.load %arg1[%c9] : memref<10xf32, #tpu.memory_space<smem>>
    %c0_2 = arith.constant 0 : index
    %11 = memref.load %arg2[%c0_2] : memref<10xf32, #tpu.memory_space<smem>>
    %c1_3 = arith.constant 1 : index
    %12 = memref.load %arg2[%c1_3] : memref<10xf32, #tpu.memory_space<smem>>
    %c2_4 = arith.constant 2 : index
    %13 = memref.load %arg2[%c2_4] : memref<10xf32, #tpu.memory_space<smem>>
    %c3_5 = arith.constant 3 : index
    %14 = memref.load %arg2[%c3_5] : memref<10xf32, #tpu.memory_space<smem>>
    %c4_6 = arith.constant 4 : index
    %15 = memref.load %arg2[%c4_6] : memref<10xf32, #tpu.memory_space<smem>>
    %c5_7 = arith.constant 5 : index
    %16 = memref.load %arg2[%c5_7] : memref<10xf32, #tpu.memory_space<smem>>
    %c6_8 = arith.constant 6 : index
    %17 = memref.load %arg2[%c6_8] : memref<10xf32, #tpu.memory_space<smem>>
    %c7_9 = arith.constant 7 : index
    %18 = memref.load %arg2[%c7_9] : memref<10xf32, #tpu.memory_space<smem>>
    %c8_10 = arith.constant 8 : index
    %19 = memref.load %arg2[%c8_10] : memref<10xf32, #tpu.memory_space<smem>>
    %c9_11 = arith.constant 9 : index
    %20 = memref.load %arg2[%c9_11] : memref<10xf32, #tpu.memory_space<smem>>
    %c0_12 = arith.constant 0 : index
    %21 = memref.load %arg3[%c0_12] : memref<10xf32, #tpu.memory_space<smem>>
    %c1_13 = arith.constant 1 : index
    %22 = memref.load %arg3[%c1_13] : memref<10xf32, #tpu.memory_space<smem>>
    %c2_14 = arith.constant 2 : index
    %23 = memref.load %arg3[%c2_14] : memref<10xf32, #tpu.memory_space<smem>>
    %c3_15 = arith.constant 3 : index
    %24 = memref.load %arg3[%c3_15] : memref<10xf32, #tpu.memory_space<smem>>
    %c4_16 = arith.constant 4 : index
    %25 = memref.load %arg3[%c4_16] : memref<10xf32, #tpu.memory_space<smem>>
    %c5_17 = arith.constant 5 : index
    %26 = memref.load %arg3[%c5_17] : memref<10xf32, #tpu.memory_space<smem>>
    %c6_18 = arith.constant 6 : index
    %27 = memref.load %arg3[%c6_18] : memref<10xf32, #tpu.memory_space<smem>>
    %c7_19 = arith.constant 7 : index
    %28 = memref.load %arg3[%c7_19] : memref<10xf32, #tpu.memory_space<smem>>
    %c8_20 = arith.constant 8 : index
    %29 = memref.load %arg3[%c8_20] : memref<10xf32, #tpu.memory_space<smem>>
    %c9_21 = arith.constant 9 : index
    %30 = memref.load %arg3[%c9_21] : memref<10xf32, #tpu.memory_space<smem>>
    %31 = vector.broadcast %1 : f32 to vector<16x128xf32>
    %32 = arith.mulf %0, %31 : vector<16x128xf32>
    %33 = vector.broadcast %11 : f32 to vector<16x128xf32>
    %34 = arith.subf %32, %33 : vector<16x128xf32>
    %35 = arith.mulf %34, %34 : vector<16x128xf32>
    %36 = vector.broadcast %21 : f32 to vector<16x128xf32>
    %37 = arith.subf %36, %35 : vector<16x128xf32>
    %38 = vector.broadcast %2 : f32 to vector<16x128xf32>
    %39 = arith.mulf %0, %38 : vector<16x128xf32>
    %40 = vector.broadcast %12 : f32 to vector<16x128xf32>
    %41 = arith.subf %39, %40 : vector<16x128xf32>
    %42 = arith.mulf %41, %41 : vector<16x128xf32>
    %43 = vector.broadcast %22 : f32 to vector<16x128xf32>
    %44 = arith.subf %43, %42 : vector<16x128xf32>
    %45 = arith.maximumf %37, %44 : vector<16x128xf32>
    %46 = vector.broadcast %3 : f32 to vector<16x128xf32>
    %47 = arith.mulf %0, %46 : vector<16x128xf32>
    %48 = vector.broadcast %13 : f32 to vector<16x128xf32>
    %49 = arith.subf %47, %48 : vector<16x128xf32>
    %50 = arith.mulf %49, %49 : vector<16x128xf32>
    %51 = vector.broadcast %23 : f32 to vector<16x128xf32>
    %52 = arith.subf %51, %50 : vector<16x128xf32>
    %53 = arith.maximumf %45, %52 : vector<16x128xf32>
    %54 = vector.broadcast %4 : f32 to vector<16x128xf32>
    %55 = arith.mulf %0, %54 : vector<16x128xf32>
    %56 = vector.broadcast %14 : f32 to vector<16x128xf32>
    %57 = arith.subf %55, %56 : vector<16x128xf32>
    %58 = arith.mulf %57, %57 : vector<16x128xf32>
    %59 = vector.broadcast %24 : f32 to vector<16x128xf32>
    %60 = arith.subf %59, %58 : vector<16x128xf32>
    %61 = arith.maximumf %53, %60 : vector<16x128xf32>
    %62 = vector.broadcast %5 : f32 to vector<16x128xf32>
    %63 = arith.mulf %0, %62 : vector<16x128xf32>
    %64 = vector.broadcast %15 : f32 to vector<16x128xf32>
    %65 = arith.subf %63, %64 : vector<16x128xf32>
    %66 = arith.mulf %65, %65 : vector<16x128xf32>
    %67 = vector.broadcast %25 : f32 to vector<16x128xf32>
    %68 = arith.subf %67, %66 : vector<16x128xf32>
    %69 = arith.maximumf %61, %68 : vector<16x128xf32>
    %70 = vector.broadcast %6 : f32 to vector<16x128xf32>
    %71 = arith.mulf %0, %70 : vector<16x128xf32>
    %72 = vector.broadcast %16 : f32 to vector<16x128xf32>
    %73 = arith.subf %71, %72 : vector<16x128xf32>
    %74 = arith.mulf %73, %73 : vector<16x128xf32>
    %75 = vector.broadcast %26 : f32 to vector<16x128xf32>
    %76 = arith.subf %75, %74 : vector<16x128xf32>
    %77 = arith.maximumf %69, %76 : vector<16x128xf32>
    %78 = vector.broadcast %7 : f32 to vector<16x128xf32>
    %79 = arith.mulf %0, %78 : vector<16x128xf32>
    %80 = vector.broadcast %17 : f32 to vector<16x128xf32>
    %81 = arith.subf %79, %80 : vector<16x128xf32>
    %82 = arith.mulf %81, %81 : vector<16x128xf32>
    %83 = vector.broadcast %27 : f32 to vector<16x128xf32>
    %84 = arith.subf %83, %82 : vector<16x128xf32>
    %85 = arith.maximumf %77, %84 : vector<16x128xf32>
    %86 = vector.broadcast %8 : f32 to vector<16x128xf32>
    %87 = arith.mulf %0, %86 : vector<16x128xf32>
    %88 = vector.broadcast %18 : f32 to vector<16x128xf32>
    %89 = arith.subf %87, %88 : vector<16x128xf32>
    %90 = arith.mulf %89, %89 : vector<16x128xf32>
    %91 = vector.broadcast %28 : f32 to vector<16x128xf32>
    %92 = arith.subf %91, %90 : vector<16x128xf32>
    %93 = arith.maximumf %85, %92 : vector<16x128xf32>
    %94 = vector.broadcast %9 : f32 to vector<16x128xf32>
    %95 = arith.mulf %0, %94 : vector<16x128xf32>
    %96 = vector.broadcast %19 : f32 to vector<16x128xf32>
    %97 = arith.subf %95, %96 : vector<16x128xf32>
    %98 = arith.mulf %97, %97 : vector<16x128xf32>
    %99 = vector.broadcast %29 : f32 to vector<16x128xf32>
    %100 = arith.subf %99, %98 : vector<16x128xf32>
    %101 = arith.maximumf %93, %100 : vector<16x128xf32>
    %102 = vector.broadcast %10 : f32 to vector<16x128xf32>
    %103 = arith.mulf %0, %102 : vector<16x128xf32>
    %104 = vector.broadcast %20 : f32 to vector<16x128xf32>
    %105 = arith.subf %103, %104 : vector<16x128xf32>
    %106 = arith.mulf %105, %105 : vector<16x128xf32>
    %107 = vector.broadcast %30 : f32 to vector<16x128xf32>
    %108 = arith.subf %107, %106 : vector<16x128xf32>
    %109 = arith.maximumf %101, %108 : vector<16x128xf32>
    %110 = vector.broadcast %1 : f32 to vector<16x128xf32>
    %111 = arith.mulf %0, %110 : vector<16x128xf32>
    %112 = vector.broadcast %11 : f32 to vector<16x128xf32>
    %113 = arith.subf %111, %112 : vector<16x128xf32>
    %114 = arith.mulf %113, %113 : vector<16x128xf32>
    %115 = vector.broadcast %21 : f32 to vector<16x128xf32>
    %116 = arith.subf %115, %114 : vector<16x128xf32>
    %117 = arith.subf %116, %109 : vector<16x128xf32>
    %118 = math.exp %117 : vector<16x128xf32>
    %119 = vector.broadcast %2 : f32 to vector<16x128xf32>
    %120 = arith.mulf %0, %119 : vector<16x128xf32>
    %121 = vector.broadcast %12 : f32 to vector<16x128xf32>
    %122 = arith.subf %120, %121 : vector<16x128xf32>
    %123 = arith.mulf %122, %122 : vector<16x128xf32>
    %124 = vector.broadcast %22 : f32 to vector<16x128xf32>
    %125 = arith.subf %124, %123 : vector<16x128xf32>
    %126 = arith.subf %125, %109 : vector<16x128xf32>
    %127 = math.exp %126 : vector<16x128xf32>
    %128 = arith.addf %118, %127 : vector<16x128xf32>
    %129 = vector.broadcast %3 : f32 to vector<16x128xf32>
    %130 = arith.mulf %0, %129 : vector<16x128xf32>
    %131 = vector.broadcast %13 : f32 to vector<16x128xf32>
    %132 = arith.subf %130, %131 : vector<16x128xf32>
    %133 = arith.mulf %132, %132 : vector<16x128xf32>
    %134 = vector.broadcast %23 : f32 to vector<16x128xf32>
    %135 = arith.subf %134, %133 : vector<16x128xf32>
    %136 = arith.subf %135, %109 : vector<16x128xf32>
    %137 = math.exp %136 : vector<16x128xf32>
    %138 = arith.addf %128, %137 : vector<16x128xf32>
    %139 = vector.broadcast %4 : f32 to vector<16x128xf32>
    %140 = arith.mulf %0, %139 : vector<16x128xf32>
    %141 = vector.broadcast %14 : f32 to vector<16x128xf32>
    %142 = arith.subf %140, %141 : vector<16x128xf32>
    %143 = arith.mulf %142, %142 : vector<16x128xf32>
    %144 = vector.broadcast %24 : f32 to vector<16x128xf32>
    %145 = arith.subf %144, %143 : vector<16x128xf32>
    %146 = arith.subf %145, %109 : vector<16x128xf32>
    %147 = math.exp %146 : vector<16x128xf32>
    %148 = arith.addf %138, %147 : vector<16x128xf32>
    %149 = vector.broadcast %5 : f32 to vector<16x128xf32>
    %150 = arith.mulf %0, %149 : vector<16x128xf32>
    %151 = vector.broadcast %15 : f32 to vector<16x128xf32>
    %152 = arith.subf %150, %151 : vector<16x128xf32>
    %153 = arith.mulf %152, %152 : vector<16x128xf32>
    %154 = vector.broadcast %25 : f32 to vector<16x128xf32>
    %155 = arith.subf %154, %153 : vector<16x128xf32>
    %156 = arith.subf %155, %109 : vector<16x128xf32>
    %157 = math.exp %156 : vector<16x128xf32>
    %158 = arith.addf %148, %157 : vector<16x128xf32>
    %159 = vector.broadcast %6 : f32 to vector<16x128xf32>
    %160 = arith.mulf %0, %159 : vector<16x128xf32>
    %161 = vector.broadcast %16 : f32 to vector<16x128xf32>
    %162 = arith.subf %160, %161 : vector<16x128xf32>
    %163 = arith.mulf %162, %162 : vector<16x128xf32>
    %164 = vector.broadcast %26 : f32 to vector<16x128xf32>
    %165 = arith.subf %164, %163 : vector<16x128xf32>
    %166 = arith.subf %165, %109 : vector<16x128xf32>
    %167 = math.exp %166 : vector<16x128xf32>
    %168 = arith.addf %158, %167 : vector<16x128xf32>
    %169 = vector.broadcast %7 : f32 to vector<16x128xf32>
    %170 = arith.mulf %0, %169 : vector<16x128xf32>
    %171 = vector.broadcast %17 : f32 to vector<16x128xf32>
    %172 = arith.subf %170, %171 : vector<16x128xf32>
    %173 = arith.mulf %172, %172 : vector<16x128xf32>
    %174 = vector.broadcast %27 : f32 to vector<16x128xf32>
    %175 = arith.subf %174, %173 : vector<16x128xf32>
    %176 = arith.subf %175, %109 : vector<16x128xf32>
    %177 = math.exp %176 : vector<16x128xf32>
    %178 = arith.addf %168, %177 : vector<16x128xf32>
    %179 = vector.broadcast %8 : f32 to vector<16x128xf32>
    %180 = arith.mulf %0, %179 : vector<16x128xf32>
    %181 = vector.broadcast %18 : f32 to vector<16x128xf32>
    %182 = arith.subf %180, %181 : vector<16x128xf32>
    %183 = arith.mulf %182, %182 : vector<16x128xf32>
    %184 = vector.broadcast %28 : f32 to vector<16x128xf32>
    %185 = arith.subf %184, %183 : vector<16x128xf32>
    %186 = arith.subf %185, %109 : vector<16x128xf32>
    %187 = math.exp %186 : vector<16x128xf32>
    %188 = arith.addf %178, %187 : vector<16x128xf32>
    %189 = vector.broadcast %9 : f32 to vector<16x128xf32>
    %190 = arith.mulf %0, %189 : vector<16x128xf32>
    %191 = vector.broadcast %19 : f32 to vector<16x128xf32>
    %192 = arith.subf %190, %191 : vector<16x128xf32>
    %193 = arith.mulf %192, %192 : vector<16x128xf32>
    %194 = vector.broadcast %29 : f32 to vector<16x128xf32>
    %195 = arith.subf %194, %193 : vector<16x128xf32>
    %196 = arith.subf %195, %109 : vector<16x128xf32>
    %197 = math.exp %196 : vector<16x128xf32>
    %198 = arith.addf %188, %197 : vector<16x128xf32>
    %199 = vector.broadcast %10 : f32 to vector<16x128xf32>
    %200 = arith.mulf %0, %199 : vector<16x128xf32>
    %201 = vector.broadcast %20 : f32 to vector<16x128xf32>
    %202 = arith.subf %200, %201 : vector<16x128xf32>
    %203 = arith.mulf %202, %202 : vector<16x128xf32>
    %204 = vector.broadcast %30 : f32 to vector<16x128xf32>
    %205 = arith.subf %204, %203 : vector<16x128xf32>
    %206 = arith.subf %205, %109 : vector<16x128xf32>
    %207 = math.exp %206 : vector<16x128xf32>
    %208 = arith.addf %198, %207 : vector<16x128xf32>
    %209 = math.log %208 : vector<16x128xf32>
    %210 = arith.addf %109, %209 : vector<16x128xf32>
    %cst = arith.constant dense<0.000000e+00> : vector<128xf32>
    %211 = vector.multi_reduction <add>, %210, %cst [0] : vector<16x128xf32> to vector<128xf32>
    %212 = vector.shape_cast %211 : vector<128xf32> to vector<1x128xf32>
    %c0_22 = arith.constant 0 : index
    %c0_23 = arith.constant 0 : index
    %213 = vector.load %arg5[%c0_22, %c0_23] : memref<1x128xf32, #tpu.memory_space<vmem>>, vector<1x128xf32>
    tpu.vector_store %arg5[%c0_22, %c0_23], %212 {strides = array<i32>} : memref<1x128xf32, #tpu.memory_space<vmem>>, vector<1x128xf32>,
    return
  }
  func.func @transform_0(%arg0: i32) -> i32 {
    %c0_i32 = arith.constant 0 : i32
    %c0_i32_0 = arith.constant 0 : i32
    return %c0_i32 : i32
  }
  func.func @transform_1(%arg0: i32) -> i32 {
    %c0_i32 = arith.constant 0 : i32
    %c0_i32_0 = arith.constant 0 : i32
    return %c0_i32 : i32
  }
  func.func @transform_2(%arg0: i32) -> i32 {
    %c0_i32 = arith.constant 0 : i32
    %c0_i32_0 = arith.constant 0 : i32
    return %c0_i32 : i32
  }
  func.func @transform_3(%arg0: i32) -> (i32, i32) {
    %c0_i32 = arith.constant 0 : i32
    %c0_i32_0 = arith.constant 0 : i32
    return %c0_i32, %arg0 : i32, i32
  }
  func.func @transform_4(%arg0: i32) -> (i32, i32) {
    %c0_i32 = arith.constant 0 : i32
    %c0_i32_0 = arith.constant 0 : i32
    return %c0_i32, %arg0 : i32, i32
  }
}

</mosaic_0001>

<llo_original>
// kernel: tpu_custom_call.1
$region0: #{tpu_custom_call.1}
  #allocation0 [shape = 'u32[]', space=smem, size = 0x4, offset = 0x4, fixed_abs, tag = 'smem constant byte address 0x4 - core index']
  #allocation1 [shape = 'u32[72,128]{1,0:T(1,128)}', space=vmem, size = 0x9000, scoped, tag = 'internal scratch']
  %s0 = inlined_call_operand.hbm [shape: f32[10], index: 0, kind: input, shape index: {}]
  %s1 = inlined_call_operand.hbm [shape: f32[10], index: 1, kind: input, shape index: {}]
  %s2 = inlined_call_operand.vmem [shape: f32[10], index: 2, kind: input, shape index: {}]
  %s3 = inlined_call_operand.hbm [shape: f32[16,128], index: 3, kind: input, shape index: {}]
  %s4 = inlined_call_operand.hbm [shape: f32[1,128], index: 4, kind: output, shape index: {}]
  %s5 = sld [smem:[#allocation0]]
  $region42: #{tpu_custom_call.1} parent=0
    _
  %s7 = ssub.s32 1, %s5
  %s8 = scalar_select 0, %s7, %s5
  $region1: #{tpu_custom_call.1} parent=0
    #allocation2 [shape = 'u8[512]{0}', space=smem, size = 0x200, scoped, tag = 'input window, operand 0, single buffered']
    #allocation3 [shape = 's32[1]{0}', space=sflag, size = 0x4, scoped, tag = 'scoped memory for tpu_custom_call.1']
    #allocation4 [shape = 's32[1]{0}', space=sflag, size = 0x4, scoped, tag = 'scoped memory for tpu_custom_call.1']
    #allocation5 [shape = 's32[1]{0}', space=sflag, size = 0x4, scoped, tag = 'scoped memory for tpu_custom_call.1']
    #allocation6 [shape = 's32[1]{0}', space=sflag, size = 0x4, scoped, tag = 'scoped memory for tpu_custom_call.1']
    #allocation7 [shape = 'u8[512]{0}', space=smem, size = 0x200, scoped, tag = 'input window, operand 1, single buffered']
    #allocation8 [shape = 's32[1]{0}', space=sflag, size = 0x4, scoped, tag = 'scoped memory for tpu_custom_call.1']
    #allocation9 [shape = 'u8[512]{0}', space=smem, size = 0x200, scoped, tag = 'input window, operand 2, single buffered']
    #allocation10 [shape = 'u8[8192]{0}', space=vmem, size = 0x2000, scoped, tag = 'input window, operand 3, single buffered']
    #allocation11 [shape = 'u8[512]{0}', space=vmem, size = 0x400, scoped, tag = 'output window, operand 0, single buffered']
    %9 = vsyncpa [#allocation5], 0
    %10 = vsyncpa [#allocation8], 0
    %11 = vsyncpa [#allocation6], 0
    %12 = vsyncpa [#allocation3], 0
    %13 = vsyncpa [#allocation4], 0
    // Predicated region
    $region2: #{tpu_custom_call.1} parent=1 // pred_check
      _
    $region3: #{tpu_custom_call.1} parent=1 // pred_check_branch
      %15 = sbr.rel (0) target = $region5
    $region4: #{tpu_custom_call.1} parent=1 // pred_region
      %17 = vsyncadd [#allocation5], 0
      %s19 = sshll.u32 %s0, 4
      %s20 = int_to_ptr.hbm [resolvable:$true] %s19
      %22 = dma.hbm_to_smem %s20, 16, [#allocation2], [#allocation5]
    $region5: #{tpu_custom_call.1} parent=1 // pred_fallthru
      _
    // Predicated region
    $region6: #{tpu_custom_call.1} parent=1 // pred_check
      _
    $region7: #{tpu_custom_call.1} parent=1 // pred_check_branch
      %24 = sbr.rel (0) target = $region9
    $region8: #{tpu_custom_call.1} parent=1 // pred_region
      %26 = vsyncadd [#allocation8], 0
      %s28 = sshll.u32 %s1, 4
      %s29 = int_to_ptr.hbm [resolvable:$true] %s28
      %31 = dma.hbm_to_smem %s29, 16, [#allocation7], [#allocation8]
    $region9: #{tpu_custom_call.1} parent=1 // pred_fallthru
      _
    // Predicated region
    $region10: #{tpu_custom_call.1} parent=1 // pred_check
      _
    $region11: #{tpu_custom_call.1} parent=1 // pred_check_branch
      %33 = sbr.rel (0) target = $region13
    $region12: #{tpu_custom_call.1} parent=1 // pred_region
      %35 = vsyncadd [#allocation6], 0
      %s37 = sshll.u32 %s2, 4
      %s38 = int_to_ptr.vmem [resolvable:$true] %s37
      %40 = dma.vmem_to_smem %s38, 16, [#allocation9], [#allocation6]
    $region13: #{tpu_custom_call.1} parent=1 // pred_fallthru
      _
    // Predicated region
    $region14: #{tpu_custom_call.1} parent=1 // pred_check
      _
    $region15: #{tpu_custom_call.1} parent=1 // pred_check_branch
      %42 = sbr.rel (0) target = $region17
    $region16: #{tpu_custom_call.1} parent=1 // pred_region
      %44 = vsyncadd [#allocation3], 0
      %s45 = sshll.u32 %s3, 4
      %s46 = int_to_ptr.hbm [resolvable:$true] %s45
      %s47 = sshll.u32 [#allocation10], 4
      %s48 = int_to_ptr.vmem [resolvable:$true] %s47
      %53 = dma.hbm_to_vmem [thread:$0]  %s46, 256, %s48, [#allocation3], 128, 128, 8
    $region17: #{tpu_custom_call.1} parent=1 // pred_fallthru
      _
    // Predicated region
    $region18: #{tpu_custom_call.1} parent=1 // pred_check
      _
    $region19: #{tpu_custom_call.1} parent=1 // pred_check_branch
      %55 = sbr.rel (0) target = $region21
    $region20: #{tpu_custom_call.1} parent=1 // pred_region
      %57 = dma.done [#allocation5], 16
    $region21: #{tpu_custom_call.1} parent=1 // pred_fallthru
      _
    // Predicated region
    $region22: #{tpu_custom_call.1} parent=1 // pred_check
      _
    $region23: #{tpu_custom_call.1} parent=1 // pred_check_branch
      %59 = sbr.rel (0) target = $region25
    $region24: #{tpu_custom_call.1} parent=1 // pred_region
      %61 = dma.done [#allocation8], 16
    $region25: #{tpu_custom_call.1} parent=1 // pred_fallthru
      _
    // Predicated region
    $region26: #{tpu_custom_call.1} parent=1 // pred_check
      _
    $region27: #{tpu_custom_call.1} parent=1 // pred_check_branch
      %63 = sbr.rel (0) target = $region29
    $region28: #{tpu_custom_call.1} parent=1 // pred_region
      %65 = dma.done [#allocation6], 16
    $region29: #{tpu_custom_call.1} parent=1 // pred_fallthru
      _
    // Predicated region
    $region30: #{tpu_custom_call.1} parent=1 // pred_check
      _
    $region31: #{tpu_custom_call.1} parent=1 // pred_check_branch
      %67 = sbr.rel (0) target = $region33
    $region32: #{tpu_custom_call.1} parent=1 // pred_region
      %69 = dma.done [#allocation3], 256
    $region33: #{tpu_custom_call.1} parent=1 // pred_fallthru
      _
    %70 = sfence
    %v71 = vld [vmem:[#allocation10] sm:$0xff]
    %v72 = vld [vmem:[#allocation10 + $0x8] sm:$0xff]
    %s73 = sld [smem:[#allocation2]]
    %s74 = sld [smem:[#allocation2 + $0x1]]
    %s75 = sld [smem:[#allocation2 + $0x2]]
    %s76 = sld [smem:[#allocation2 + $0x3]]
    %s77 = sld [smem:[#allocation2 + $0x4]]
    %s78 = sld [smem:[#allocation2 + $0x5]]
    %s79 = sld [smem:[#allocation2 + $0x6]]
    %s80 = sld [smem:[#allocation2 + $0x7]]
    %s81 = sld [smem:[#allocation2 + $0x8]]
    %s82 = sld [smem:[#allocation2 + $0x9]]
    %s83 = sld [smem:[#allocation7]]
    %s84 = sld [smem:[#allocation7 + $0x1]]
    %s85 = sld [smem:[#allocation7 + $0x2]]
    %s86 = sld [smem:[#allocation7 + $0x3]]
    %s87 = sld [smem:[#allocation7 + $0x4]]
    %s88 = sld [smem:[#allocation7 + $0x5]]
    %s89 = sld [smem:[#allocation7 + $0x6]]
    %s90 = sld [smem:[#allocation7 + $0x7]]
    %s91 = sld [smem:[#allocation7 + $0x8]]
    %s92 = sld [smem:[#allocation7 + $0x9]]
    %s93 = sld [smem:[#allocation9]]
    %s94 = sld [smem:[#allocation9 + $0x1]]
    %s95 = sld [smem:[#allocation9 + $0x2]]
    %s96 = sld [smem:[#allocation9 + $0x3]]
    %s97 = sld [smem:[#allocation9 + $0x4]]
    %s98 = sld [smem:[#allocation9 + $0x5]]
    %s99 = sld [smem:[#allocation9 + $0x6]]
    %s100 = sld [smem:[#allocation9 + $0x7]]
    %s101 = sld [smem:[#allocation9 + $0x8]]
    %s102 = sld [smem:[#allocation9 + $0x9]]
    %v103 = vstv %s73
    %v104 = vmul.f32 %v71, %v103
    %v105 = vmul.f32 %v72, %v103
    %v106 = vstv %s83
    %v107 = vsub.f32 %v104, %v106
    %v108 = vsub.f32 %v105, %v106
    %v109 = vmul.f32 %v107, %v107
    %v110 = vmul.f32 %v108, %v108
    %v111 = vstv %s93
    %v112 = vsub.f32 %v111, %v109
    %v113 = vsub.f32 %v111, %v110
    %v114 = vstv %s74
    %v115 = vmul.f32 %v71, %v114
    %v116 = vmul.f32 %v72, %v114
    %v117 = vstv %s84
    %v118 = vsub.f32 %v115, %v117
    %v119 = vsub.f32 %v116, %v117
    %v120 = vmul.f32 %v118, %v118
    %v121 = vmul.f32 %v119, %v119
    %v122 = vstv %s94
    %v123 = vsub.f32 %v122, %v120
    %v124 = vsub.f32 %v122, %v121
    %v125 = vmax.f32 %v112, %v123
    %v126 = vmax.f32 %v113, %v124
    %v127 = vstv %s75
    %v128 = vmul.f32 %v71, %v127
    %v129 = vmul.f32 %v72, %v127
    %v130 = vstv %s85
    %v131 = vsub.f32 %v128, %v130
    %v132 = vsub.f32 %v129, %v130
    %v133 = vmul.f32 %v131, %v131
    %v134 = vmul.f32 %v132, %v132
    %v135 = vstv %s95
    %v136 = vsub.f32 %v135, %v133
    %v137 = vsub.f32 %v135, %v134
    %v138 = vmax.f32 %v125, %v136
    %v139 = vmax.f32 %v126, %v137
    %v140 = vstv %s76
    %v141 = vmul.f32 %v71, %v140
    %v142 = vmul.f32 %v72, %v140
    %v143 = vstv %s86
    %v144 = vsub.f32 %v141, %v143
    %v145 = vsub.f32 %v142, %v143
    %v146 = vmul.f32 %v144, %v144
    %v147 = vmul.f32 %v145, %v145
    %v148 = vstv %s96
    %v149 = vsub.f32 %v148, %v146
    %v150 = vsub.f32 %v148, %v147
    %v151 = vmax.f32 %v138, %v149
    %v152 = vmax.f32 %v139, %v150
    %v153 = vstv %s77
    %v154 = vmul.f32 %v71, %v153
    %v155 = vmul.f32 %v72, %v153
    %v156 = vstv %s87
    %v157 = vsub.f32 %v154, %v156
    %v158 = vsub.f32 %v155, %v156
    %v159 = vmul.f32 %v157, %v157
    %v160 = vmul.f32 %v158, %v158
    %v161 = vstv %s97
    %v162 = vsub.f32 %v161, %v159
    %v163 = vsub.f32 %v161, %v160
    %v164 = vmax.f32 %v151, %v162
    %v165 = vmax.f32 %v152, %v163
    %v166 = vstv %s78
    %v167 = vmul.f32 %v71, %v166
    %v168 = vmul.f32 %v72, %v166
    %v169 = vstv %s88
    %v170 = vsub.f32 %v167, %v169
    %v171 = vsub.f32 %v168, %v169
    %v172 = vmul.f32 %v170, %v170
    %v173 = vmul.f32 %v171, %v171
    %v174 = vstv %s98
    %v175 = vsub.f32 %v174, %v172
    %v176 = vsub.f32 %v174, %v173
    %v177 = vmax.f32 %v164, %v175
    %v178 = vmax.f32 %v165, %v176
    %v179 = vstv %s79
    %v180 = vmul.f32 %v71, %v179
    %v181 = vmul.f32 %v72, %v179
    %v182 = vstv %s89
    %v183 = vsub.f32 %v180, %v182
    %v184 = vsub.f32 %v181, %v182
    %v185 = vmul.f32 %v183, %v183
    %v186 = vmul.f32 %v184, %v184
    %v187 = vstv %s99
    %v188 = vsub.f32 %v187, %v185
    %v189 = vsub.f32 %v187, %v186
    %v190 = vmax.f32 %v177, %v188
    %v191 = vmax.f32 %v178, %v189
    %v192 = vstv %s80
    %v193 = vmul.f32 %v71, %v192
    %v194 = vmul.f32 %v72, %v192
    %v195 = vstv %s90
    %v196 = vsub.f32 %v193, %v195
    %v197 = vsub.f32 %v194, %v195
    %v198 = vmul.f32 %v196, %v196
    %v199 = vmul.f32 %v197, %v197
    %v200 = vstv %s100
    %v201 = vsub.f32 %v200, %v198
    %v202 = vsub.f32 %v200, %v199
    %v203 = vmax.f32 %v190, %v201
    %v204 = vmax.f32 %v191, %v202
    %v205 = vstv %s81
    %v206 = vmul.f32 %v71, %v205
    %v207 = vmul.f32 %v72, %v205
    %v208 = vstv %s91
    %v209 = vsub.f32 %v206, %v208
    %v210 = vsub.f32 %v207, %v208
    %v211 = vmul.f32 %v209, %v209
    %v212 = vmul.f32 %v210, %v210
    %v213 = vstv %s101
    %v214 = vsub.f32 %v213, %v211
    %v215 = vsub.f32 %v213, %v212
    %v216 = vmax.f32 %v203, %v214
    %v217 = vmax.f32 %v204, %v215
    %v218 = vstv %s82
    %v219 = vmul.f32 %v71, %v218
    %v220 = vmul.f32 %v72, %v218
    %v221 = vstv %s92
    %v222 = vsub.f32 %v219, %v221
    %v223 = vsub.f32 %v220, %v221
    %v224 = vmul.f32 %v222, %v222
    %v225 = vmul.f32 %v223, %v223
    %v226 = vstv %s102
    %v227 = vsub.f32 %v226, %v224
    %v228 = vsub.f32 %v226, %v225
    %v229 = vmax.f32 %v216, %v227
    %v230 = vmax.f32 %v217, %v228
    %v231 = vsub.f32 %v112, %v229
    %v232 = vsub.f32 %v113, %v230
    %v233 = vmul.f32 %v231, 1.442695
    %v234 = vpow.pop %v233
    %v235 = vmul.f32 %v232, 1.442695
    %v236 = vpow.pop %v235
    %v237 = vsub.f32 %v123, %v229
    %v238 = vsub.f32 %v124, %v230
    %v239 = vmul.f32 %v237, 1.442695
    %v240 = vpow.pop %v239
    %v241 = vmul.f32 %v238, 1.442695
    %v242 = vpow.pop %v241
    %v243 = vadd.f32 %v234, %v240
    %v244 = vadd.f32 %v236, %v242
    %v245 = vsub.f32 %v136, %v229
    %v246 = vsub.f32 %v137, %v230
    %v247 = vmul.f32 %v245, 1.442695
    %v248 = vpow.pop %v247
    %v249 = vmul.f32 %v246, 1.442695
    %v250 = vpow.pop %v249
    %v251 = vadd.f32 %v243, %v248
    %v252 = vadd.f32 %v244, %v250
    %v253 = vsub.f32 %v149, %v229
    %v254 = vsub.f32 %v150, %v230
    %v255 = vmul.f32 %v253, 1.442695
    %v256 = vpow.pop %v255
    %v257 = vmul.f32 %v254, 1.442695
    %v258 = vpow.pop %v257
    %v259 = vadd.f32 %v251, %v256
    %v260 = vadd.f32 %v252, %v258
    %v261 = vsub.f32 %v162, %v229
    %v262 = vsub.f32 %v163, %v230
    %v263 = vmul.f32 %v261, 1.442695
    %v264 = vpow.pop %v263
    %v265 = vmul.f32 %v262, 1.442695
    %v266 = vpow.pop %v265
    %v267 = vadd.f32 %v259, %v264
    %v268 = vadd.f32 %v260, %v266
    %v269 = vsub.f32 %v175, %v229
    %v270 = vsub.f32 %v176, %v230
    %v271 = vmul.f32 %v269, 1.442695
    %v272 = vpow.pop %v271
    %v273 = vmul.f32 %v270, 1.442695
    %v274 = vpow.pop %v273
    %v275 = vadd.f32 %v267, %v272
    %v276 = vadd.f32 %v268, %v274
    %v277 = vsub.f32 %v188, %v229
    %v278 = vsub.f32 %v189, %v230
    %v279 = vmul.f32 %v277, 1.442695
    %v280 = vpow.pop %v279
    %v281 = vmul.f32 %v278, 1.442695
    %v282 = vpow.pop %v281
    %v283 = vadd.f32 %v275, %v280
    %v284 = vadd.f32 %v276, %v282
    %v285 = vsub.f32 %v201, %v229
    %v286 = vsub.f32 %v202, %v230
    %v287 = vmul.f32 %v285, 1.442695
    %v288 = vpow.pop %v287
    %v289 = vmul.f32 %v286, 1.442695
    %v290 = vpow.pop %v289
    %v291 = vadd.f32 %v283, %v288
    %v292 = vadd.f32 %v284, %v290
    %v293 = vsub.f32 %v214, %v229
    %v294 = vsub.f32 %v215, %v230
    %v295 = vmul.f32 %v293, 1.442695
    %v296 = vpow.pop %v295
    %v297 = vmul.f32 %v294, 1.442695
    %v298 = vpow.pop %v297
    %v299 = vadd.f32 %v291, %v296
    %v300 = vadd.f32 %v292, %v298
    %v301 = vsub.f32 %v227, %v229
    %v302 = vsub.f32 %v228, %v230
    %v303 = vmul.f32 %v301, 1.442695
    %v304 = vpow.pop %v303
    %v305 = vmul.f32 %v302, 1.442695
    %v306 = vpow.pop %v305
    %v307 = vadd.f32 %v299, %v304
    %v308 = vadd.f32 %v300, %v306
    %v309 = vlog2.pop %v307
    %v310 = vmul.f32 %v309, 0.6931472
    %v311 = vlog2.pop %v308
    %v312 = vmul.f32 %v311, 0.6931472
    %v313 = vadd.f32 %v229, %v310
    %v314 = vadd.f32 %v230, %v312
    %v315 = vadd.f32 %v313, %v314
    %v316 = vrot.slane %v315, 4
    %v317 = vadd.f32 %v315, %v316
    %v318 = vrot.slane %v317, 2
    %v319 = vadd.f32 %v317, %v318
    %v320 = vrot.slane %v319, 1
    %v321 = vadd.f32 %v319, %v320
    %322 = vst [vmem:[#allocation11] sm:$0x1] %v321
    // Predicated region
    $region34: #{tpu_custom_call.1} parent=1 // pred_check
      _
    $region35: #{tpu_custom_call.1} parent=1 // pred_check_branch
      %324 = sbr.rel (0) target = $region37
    $region36: #{tpu_custom_call.1} parent=1 // pred_region
      %326 = vsyncadd [#allocation4], 0
      %s328 = sshll.u32 [#allocation11], 4
      %s329 = int_to_ptr.vmem [resolvable:$true] %s328
      %s330 = sshll.u32 %s4, 4
      %s331 = int_to_ptr.hbm [resolvable:$true] %s330
      %333 = dma.vmem_to_hbm [thread:$0]  %s329, 16, %s331, [#allocation4]
    $region37: #{tpu_custom_call.1} parent=1 // pred_fallthru
      _
    // Predicated region
    $region38: #{tpu_custom_call.1} parent=1 // pred_check
      _
    $region39: #{tpu_custom_call.1} parent=1 // pred_check_branch
      %335 = sbr.rel (0) target = $region41
    $region40: #{tpu_custom_call.1} parent=1 // pred_region
      %337 = dma.done [#allocation4], 16
    $region41: #{tpu_custom_call.1} parent=1 // pred_fallthru
      _
    %338 = vsyncpa [#allocation3], 1
    %339 = vsyncpa [#allocation4], 1
    %340 = vsyncpa [#allocation5], 1
    %341 = vsyncpa [#allocation8], 1
    %342 = vsyncpa [#allocation6], 1

</llo_original>
